<compile_context>
chip_gen: v5e
topology: v5e:2x2
jax: 0.10.0
libtpu: 0.0.40
codegen_flags: <defaults>
</compile_context>

<pallas_src>
import functools

import jax
import jax.numpy as jnp
from jax import lax
from jax.experimental import pallas as pl
from jax.experimental.pallas import tpu as pltpu

EPSILON = 1e-9      # EPISILON constant in the torch module
NORM_EPS = 1e-12    # F.normalize default eps


def nce_loss_kernel(f1_ref, f2n_ref, ind2_ref, tcol_ref, trow_ref, out_ref, *,
                    temperature, matmul_dtype):
    # f1_ref:   [TM, D] f32   (tiled over rows, double-buffered)
    # f2n_ref:  [B, D]  f32/bf16 (pre-normalized, VMEM-resident across steps)
    # ind2_ref: [1, B]  f32   (1.0 where ||f2_j|| > 0 else 0.0, resident)
    # tcol_ref: [TM, 1] i32   (tiled)      trow_ref: [1, B] i32 (resident)
    # out_ref:  [TM, 1] f32   (per-row loss)
    f1 = f1_ref[...]

    # --- F.normalize(f1, dim=1) with reciprocal-multiply (EUP: TM recips) ----
    n1 = jnp.sqrt(jnp.sum(f1 * f1, axis=1, keepdims=True))          # [TM, 1]
    inv1 = pl.reciprocal(jnp.maximum(n1, NORM_EPS))                  # exact, only TM values
    f1n = f1 * inv1                                                  # VPU multiplies
    ind1 = (n1 > 0.0).astype(jnp.float32)                            # [TM, 1] norm of normalized row

    # --- pairwise cosine via Gram matrix on the MXU (f32 accumulation) -------
    # dist_ij = ind1_i + ind2_j - 2 * f1n_i . f2n_j  ->  cos = 1 - 0.5*dist
    f2n = f2n_ref[...]                                               # [B, D]
    g = lax.dot_general(f1n.astype(matmul_dtype), f2n.astype(matmul_dtype),
                        (((1,), (1,)), ((), ())),
                        preferred_element_type=jnp.float32)          # [TM, B]
    ind2 = ind2_ref[...]                                             # [1, B]
    cos = (1.0 - 0.5 * ind1 - 0.5 * ind2) + g                        # [TM, B]

    # --- softmax over dim=1 (lanes); denominator via reciprocal-multiply -----
    logits = cos * (1.0 / temperature)
    m = jnp.max(logits, axis=1, keepdims=True)                       # [TM, 1]
    e = jnp.exp(logits - m)                                          # EUP exp, [TM, B]
    s = jnp.sum(e, axis=1, keepdims=True)                            # [TM, 1]
    pred = e * pl.reciprocal(s)                                      # TM recips + VPU muls

    # --- fused masked NCE terms: one log over the whole [TM, B] tile ---------
    same = tcol_ref[...] == trow_ref[...]                            # [TM, B] bool (int compare)
    # clamp 1-pred at 0: recip-multiply rounding can push pred a hair above 1
    arg = jnp.where(same, pred, jnp.maximum(1.0 - pred, 0.0)) + EPSILON
    nll = -jnp.log(arg)                                              # single EUP log
    pos_cnt = jnp.sum(same.astype(jnp.float32), axis=1, keepdims=True)  # [TM, 1], >= 1 (diagonal)
    out_ref[...] = jnp.sum(nll, axis=1, keepdims=True) / pos_cnt     # [TM, 1]


def nce_loss(f1, f2, targets, temperature=0.1, tm=256, matmul_dtype=jnp.float32):
    """NCELoss.forward as a row-tiled Pallas call; returns the scalar loss."""
    B, D = f1.shape
    f1 = f1.astype(jnp.float32)
    f2 = f2.astype(jnp.float32)

    # f2 is resident across every grid step -> normalize it once here instead
    # of re-normalizing per tile inside the kernel.
    n2 = jnp.sqrt(jnp.sum(f2 * f2, axis=1, keepdims=True))           # [B, 1]
    f2n = (f2 / jnp.maximum(n2, NORM_EPS)).astype(matmul_dtype)      # [B, D]
    ind2 = (n2 > 0.0).astype(jnp.float32).reshape(1, B)              # zero-row indicator

    targets = targets.astype(jnp.int32)
    tcol = targets.reshape(B, 1)
    trow = targets.reshape(1, B)

    # Row-tile size: multiple of 8 sublanes (or the full B).  TM=256 keeps the
    # live set ~36 MiB at B=4096, D=1024 (fits v7x); raise on v5e/v6e.
    tm = max(8, (tm // 8) * 8)
    TM = B if B <= tm else tm
    grid = (pl.cdiv(B, TM),)

    per_row = pl.pallas_call(
        functools.partial(nce_loss_kernel,
                          temperature=float(temperature),
                          matmul_dtype=matmul_dtype),
        out_shape=jax.ShapeDtypeStruct((B, 1), jnp.float32),
        grid=grid,
        in_specs=[
            pl.BlockSpec((TM, D), lambda i: (i, 0)),   # f1 tile (double-buffered)
            pl.BlockSpec((B, D), lambda i: (0, 0)),    # f2 (normalized), resident
            pl.BlockSpec((1, B), lambda i: (0, 0)),    # f2 zero-row indicator, resident
            pl.BlockSpec((TM, 1), lambda i: (i, 0)),   # targets column tile (int32)
            pl.BlockSpec((1, B), lambda i: (0, 0)),    # targets row, resident (int32)
        ],
        out_specs=pl.BlockSpec((TM, 1), lambda i: (i, 0)),
        compiler_params=pltpu.CompilerParams(
            dimension_semantics=("parallel",),          # v7x: shard tiles across 2 TCs
            vmem_limit_bytes=48 * 1024 * 1024,          # < v7x 64 MiB physical VMEM
        ),
    )(f1, f2n, ind2, tcol, trow)
    return jnp.mean(per_row)


def nce_loss_reference(f1, f2, targets, temperature=0.1):
    """Pure-JAX mirror of the torch code (broadcast form) for correctness checking."""
    def l2norm(x):
        n = jnp.sqrt(jnp.sum(x * x, axis=1, keepdims=True))
        return x / jnp.maximum(n, NORM_EPS)

    f1n, f2n = l2norm(f1.astype(jnp.float32)), l2norm(f2.astype(jnp.float32))
    t = targets.astype(jnp.float32)
    self_mask = ((t[:, None] - t[None, :]) != 0).astype(jnp.float32)
    dist = jnp.sum((f1n[:, None, :] - f2n[None, :, :]) ** 2, axis=2)
    cos = 1.0 - 0.5 * dist
    pred = jax.nn.softmax(cos / temperature, axis=1)
    pos = 1.0 - self_mask
    log_pos = -jnp.log(pred + EPSILON) * pos
    log_neg = -jnp.log(1.0 - pred + EPSILON) * self_mask
    cnt = jnp.sum(pos, axis=1)
    per = jnp.sum(log_pos, axis=1) / cnt + jnp.sum(log_neg, axis=1) / cnt
    return jnp.mean(per)


if __name__ == "__main__":
    key = jax.random.PRNGKey(0)
    k1, k2, kt = jax.random.split(key, 3)

    # Small shapes consistent with NCELoss.forward(f1, f2, targets).
    B, D = 8, 32
    f1 = jax.random.normal(k1, (B, D), dtype=jnp.float32)
    f2 = jax.random.normal(k2, (B, D), dtype=jnp.float32)
    targets = jax.random.bernoulli(kt, 0.5, (B,)).astype(jnp.int32)

    loss = jax.block_until_ready(nce_loss(f1, f2, targets, temperature=0.1))
    ref = jax.block_until_ready(nce_loss_reference(f1, f2, targets, temperature=0.1))
    assert jnp.allclose(loss, ref, rtol=1e-3, atol=1e-3), (float(loss), float(ref))

    # Also exercise the row-tiled grid path (grid > 1) at a small size.
    B2, D2 = 16, 32
    k3, k4, k5 = jax.random.split(jax.random.PRNGKey(0), 3)
    f1b = jax.random.normal(k3, (B2, D2), dtype=jnp.float32)
    f2b = jax.random.normal(k4, (B2, D2), dtype=jnp.float32)
    tb = jax.random.bernoulli(k5, 0.5, (B2,)).astype(jnp.int32)
    loss2 = jax.block_until_ready(nce_loss(f1b, f2b, tb, temperature=0.1, tm=8))
    ref2 = jax.block_until_ready(nce_loss_reference(f1b, f2b, tb, temperature=0.1))
    assert jnp.allclose(loss2, ref2, rtol=1e-3, atol=1e-3), (float(loss2), float(ref2))

    print("KERNEL_OK")
</pallas_src>

<mosaic_0001>
module attributes {stable_mosaic.version = 11 : i64} {
  func.func @nce_loss_kernel(%arg0: i32, %arg1: memref<8x32xf32, #tpu.memory_space<vmem>>, %arg2: memref<8x32xf32, #tpu.memory_space<vmem>>, %arg3: memref<1x8xf32, #tpu.memory_space<vmem>>, %arg4: memref<8x1xi32, #tpu.memory_space<vmem>>, %arg5: memref<1x8xi32, #tpu.memory_space<vmem>>, %arg6: memref<8x1xf32, #tpu.memory_space<vmem>>) attributes {dimension_semantics = [#tpu.dimension_semantics<parallel>], iteration_bounds = array<i64: 1>, scalar_prefetch = 0 : i64, scratch_operands = 0 : i64, tpu.core_type = #tpu.core_type<tc>, window_params = [{transform_indices = @transform_0, window_bounds = array<i64: 8, 32>}, {pipeline_mode = #tpu.pipeline_mode<synchronous>, transform_indices = @transform_1, window_bounds = array<i64: 8, 32>}, {pipeline_mode = #tpu.pipeline_mode<synchronous>, transform_indices = @transform_2, window_bounds = array<i64: 1, 8>}, {transform_indices = @transform_3, window_bounds = array<i64: 8, 1>}, {pipeline_mode = #tpu.pipeline_mode<synchronous>, transform_indices = @transform_4, window_bounds = array<i64: 1, 8>}, {transform_indices = @transform_5, window_bounds = array<i64: 8, 1>}]} {
    %c0 = arith.constant 0 : index
    %c0_0 = arith.constant 0 : index
    %0 = vector.load %arg1[%c0, %c0_0] : memref<8x32xf32, #tpu.memory_space<vmem>>, vector<8x32xf32>
    %1 = arith.mulf %0, %0 : vector<8x32xf32>
    %cst = arith.constant dense<0.000000e+00> : vector<8xf32>
    %2 = vector.multi_reduction <add>, %1, %cst [1] : vector<8x32xf32> to vector<8xf32>
    %3 = vector.shape_cast %2 : vector<8xf32> to vector<8x1xf32>
    %4 = math.sqrt %3 : vector<8x1xf32>
    %cst_1 = arith.constant 9.99999996E-13 : f32
    %5 = vector.broadcast %cst_1 : f32 to vector<8x1xf32>
    %6 = arith.maximumf %4, %5 : vector<8x1xf32>
    %7 = tpu.reciprocal %6 : vector<8x1xf32> -> vector<8x1xf32>
    %8 = vector.broadcast %7 : vector<8x1xf32> to vector<8x32xf32>
    %9 = arith.mulf %0, %8 : vector<8x32xf32>
    %cst_2 = arith.constant 0.000000e+00 : f32
    %10 = vector.broadcast %cst_2 : f32 to vector<8x1xf32>
    %11 = arith.cmpf ogt, %4, %10 : vector<8x1xf32>
    %12 = arith.extui %11 : vector<8x1xi1> to vector<8x1xi32>
    %13 = arith.sitofp %12 : vector<8x1xi32> to vector<8x1xf32>
    %c0_3 = arith.constant 0 : index
    %c0_4 = arith.constant 0 : index
    %14 = vector.load %arg2[%c0_3, %c0_4] : memref<8x32xf32, #tpu.memory_space<vmem>>, vector<8x32xf32>
    %cst_5 = arith.constant dense<0.000000e+00> : vector<8x8xf32>
    %15 = tpu.matmul %9, %14, %cst_5 {dimension_numbers = #tpu.dot_dimension_numbers<[1], [1], [0], [0], [0, 0, 1, 0], [], []>} : vector<8x32xf32>, vector<8x32xf32>, vector<8x8xf32> -> vector<8x8xf32>
    %c0_6 = arith.constant 0 : index
    %c0_7 = arith.constant 0 : index
    %16 = vector.load %arg3[%c0_6, %c0_7] : memref<1x8xf32, #tpu.memory_space<vmem>>, vector<1x8xf32>
    %cst_8 = arith.constant 5.000000e-01 : f32
    %17 = vector.broadcast %cst_8 : f32 to vector<8x1xf32>
    %18 = arith.mulf %17, %13 : vector<8x1xf32>
    %cst_9 = arith.constant 1.000000e+00 : f32
    %19 = vector.broadcast %cst_9 : f32 to vector<8x1xf32>
    %20 = arith.subf %19, %18 : vector<8x1xf32>
    %cst_10 = arith.constant 5.000000e-01 : f32
    %21 = vector.broadcast %cst_10 : f32 to vector<1x8xf32>
    %22 = arith.mulf %21, %16 : vector<1x8xf32>
    %23 = vector.broadcast %20 : vector<8x1xf32> to vector<8x8xf32>
    %24 = vector.broadcast %22 : vector<1x8xf32> to vector<8x8xf32>
    %25 = arith.subf %23, %24 : vector<8x8xf32>
    %26 = arith.addf %25, %15 : vector<8x8xf32>
    %cst_11 = arith.constant 1.000000e+01 : f32
    %27 = vector.broadcast %cst_11 : f32 to vector<8x8xf32>
    %28 = arith.mulf %26, %27 : vector<8x8xf32>
    %cst_12 = arith.constant dense<0xFF800000> : vector<8xf32>
    %29 = vector.multi_reduction <maximumf>, %28, %cst_12 [1] : vector<8x8xf32> to vector<8xf32>
    %30 = vector.shape_cast %29 : vector<8xf32> to vector<8x1xf32>
    %31 = vector.broadcast %30 : vector<8x1xf32> to vector<8x8xf32>
    %32 = arith.subf %28, %31 : vector<8x8xf32>
    %33 = math.exp %32 : vector<8x8xf32>
    %cst_13 = arith.constant dense<0.000000e+00> : vector<8xf32>
    %34 = vector.multi_reduction <add>, %33, %cst_13 [1] : vector<8x8xf32> to vector<8xf32>
    %35 = vector.shape_cast %34 : vector<8xf32> to vector<8x1xf32>
    %36 = tpu.reciprocal %35 : vector<8x1xf32> -> vector<8x1xf32>
    %37 = vector.broadcast %36 : vector<8x1xf32> to vector<8x8xf32>
    %38 = arith.mulf %33, %37 : vector<8x8xf32>
    %c0_14 = arith.constant 0 : index
    %c0_15 = arith.constant 0 : index
    %39 = vector.load %arg4[%c0_14, %c0_15] : memref<8x1xi32, #tpu.memory_space<vmem>>, vector<8x1xi32>
    %c0_16 = arith.constant 0 : index
    %c0_17 = arith.constant 0 : index
    %40 = vector.load %arg5[%c0_16, %c0_17] : memref<1x8xi32, #tpu.memory_space<vmem>>, vector<1x8xi32>
    %41 = vector.broadcast %39 : vector<8x1xi32> to vector<8x8xi32>
    %42 = vector.broadcast %40 : vector<1x8xi32> to vector<8x8xi32>
    %43 = arith.cmpi eq, %41, %42 : vector<8x8xi32>
    %cst_18 = arith.constant 1.000000e+00 : f32
    %44 = vector.broadcast %cst_18 : f32 to vector<8x8xf32>
    %45 = arith.subf %44, %38 : vector<8x8xf32>
    %cst_19 = arith.constant 0.000000e+00 : f32
    %46 = vector.broadcast %cst_19 : f32 to vector<8x8xf32>
    %47 = arith.maximumf %45, %46 : vector<8x8xf32>
    %48 = arith.select %43, %38, %47 : vector<8x8xi1>, vector<8x8xf32>
    %cst_20 = arith.constant 9.99999971E-10 : f32
    %49 = vector.broadcast %cst_20 : f32 to vector<8x8xf32>
    %50 = arith.addf %48, %49 : vector<8x8xf32>
    %51 = math.log %50 : vector<8x8xf32>
    %cst_21 = arith.constant 0.000000e+00 : f32
    %52 = vector.broadcast %cst_21 : f32 to vector<8x8xf32>
    %53 = arith.subf %52, %51 : vector<8x8xf32>
    %54 = arith.extui %43 : vector<8x8xi1> to vector<8x8xi32>
    %55 = arith.sitofp %54 : vector<8x8xi32> to vector<8x8xf32>
    %cst_22 = arith.constant dense<0.000000e+00> : vector<8xf32>
    %56 = vector.multi_reduction <add>, %55, %cst_22 [1] : vector<8x8xf32> to vector<8xf32>
    %57 = vector.shape_cast %56 : vector<8xf32> to vector<8x1xf32>
    %cst_23 = arith.constant dense<0.000000e+00> : vector<8xf32>
    %58 = vector.multi_reduction <add>, %53, %cst_23 [1] : vector<8x8xf32> to vector<8xf32>
    %59 = vector.shape_cast %58 : vector<8xf32> to vector<8x1xf32>
    %60 = arith.divf %59, %57 : vector<8x1xf32>
    %c0_24 = arith.constant 0 : index
    %c0_25 = arith.constant 0 : index
    %61 = vector.load %arg6[%c0_24, %c0_25] : memref<8x1xf32, #tpu.memory_space<vmem>>, vector<8x1xf32>
    tpu.vector_store %arg6[%c0_24, %c0_25], %60 {strides = array<i32>} : memref<8x1xf32, #tpu.memory_space<vmem>>, vector<8x1xf32>,
    return
  }
  func.func @transform_0(%arg0: i32) -> (i32, i32) {
    %c0_i32 = arith.constant 0 : i32
    %c0_i32_0 = arith.constant 0 : i32
    return %arg0, %c0_i32 : i32, i32
  }
  func.func @transform_1(%arg0: i32) -> (i32, i32) {
    %c0_i32 = arith.constant 0 : i32
    %c0_i32_0 = arith.constant 0 : i32
    %c0_i32_1 = arith.constant 0 : i32
    return %c0_i32, %c0_i32_0 : i32, i32
  }
  func.func @transform_2(%arg0: i32) -> (i32, i32) {
    %c0_i32 = arith.constant 0 : i32
    %c0_i32_0 = arith.constant 0 : i32
    %c0_i32_1 = arith.constant 0 : i32
    return %c0_i32, %c0_i32_0 : i32, i32
  }
  func.func @transform_3(%arg0: i32) -> (i32, i32) {
    %c0_i32 = arith.constant 0 : i32
    %c0_i32_0 = arith.constant 0 : i32
    return %arg0, %c0_i32 : i32, i32
  }
  func.func @transform_4(%arg0: i32) -> (i32, i32) {
    %c0_i32 = arith.constant 0 : i32
    %c0_i32_0 = arith.constant 0 : i32
    %c0_i32_1 = arith.constant 0 : i32
    return %c0_i32, %c0_i32_0 : i32, i32
  }
  func.func @transform_5(%arg0: i32) -> (i32, i32) {
    %c0_i32 = arith.constant 0 : i32
    %c0_i32_0 = arith.constant 0 : i32
    return %arg0, %c0_i32 : i32, i32
  }
}

</mosaic_0001>

<llo_original>
// kernel: tpu_custom_call.1
$region0: #{tpu_custom_call.1}
  #allocation0 [shape = 'u32[]', space=smem, size = 0x4, offset = 0x4, fixed_abs, tag = 'smem constant byte address 0x4 - core index']
  #allocation1 [shape = 'u32[72,128]{1,0:T(1,128)}', space=vmem, size = 0x9000, scoped, tag = 'internal scratch']
  %s0 = inlined_call_operand.vmem [shape: f32[8,32], index: 0, kind: input, shape index: {}]
  %s1 = inlined_call_operand.hbm [shape: f32[8,32], index: 1, kind: input, shape index: {}]
  %s2 = inlined_call_operand.vmem [shape: f32[1,8], index: 2, kind: input, shape index: {}]
  %s3 = inlined_call_operand.vmem [shape: s32[8,1], index: 3, kind: input, shape index: {}]
  %s4 = inlined_call_operand.vmem [shape: s32[1,8], index: 4, kind: input, shape index: {}]
  %s5 = inlined_call_operand.vmem [shape: f32[8,1], index: 5, kind: output, shape index: {}]
  %s6 = sld [smem:[#allocation0]]
  $region34: #{tpu_custom_call.1} parent=0
    _
  %s8 = ssub.s32 1, %s6
  %s9 = scalar_select 0, %s8, %s6
  $region1: #{tpu_custom_call.1} parent=0
    #allocation2 [shape = 'u8[4096]{0}', space=vmem, size = 0x1000, scoped, tag = 'input window, operand 1, single buffered']
    #allocation3 [shape = 's32[1]{0}', space=sflag, size = 0x4, scoped, tag = 'scoped memory for tpu_custom_call.1']
    %10 = vsyncpa [#allocation3], 0
    // Predicated region
    $region2: #{tpu_custom_call.1} parent=1 // pred_check
      _
    $region3: #{tpu_custom_call.1} parent=1 // pred_check_branch
      %12 = sbr.rel (0) target = $region5
    $region4: #{tpu_custom_call.1} parent=1 // pred_region
      _
    $region5: #{tpu_custom_call.1} parent=1 // pred_fallthru
      _
    // Predicated region
    $region6: #{tpu_custom_call.1} parent=1 // pred_check
      _
    $region7: #{tpu_custom_call.1} parent=1 // pred_check_branch
      %14 = sbr.rel (0) target = $region9
    $region8: #{tpu_custom_call.1} parent=1 // pred_region
      %16 = vsyncadd [#allocation3], 0
      %s18 = sshll.u32 %s1, 4
      %s19 = int_to_ptr.hbm [resolvable:$true] %s18
      %s20 = sshll.u32 [#allocation2], 4
      %s21 = int_to_ptr.vmem [resolvable:$true] %s20
      %23 = dma.hbm_to_vmem [thread:$0]  %s19, 128, %s21, [#allocation3]
    $region9: #{tpu_custom_call.1} parent=1 // pred_fallthru
      _
    // Predicated region
    $region10: #{tpu_custom_call.1} parent=1 // pred_check
      _
    $region11: #{tpu_custom_call.1} parent=1 // pred_check_branch
      %25 = sbr.rel (0) target = $region13
    $region12: #{tpu_custom_call.1} parent=1 // pred_region
      _
    $region13: #{tpu_custom_call.1} parent=1 // pred_fallthru
      _
    // Predicated region
    $region14: #{tpu_custom_call.1} parent=1 // pred_check
      _
    $region15: #{tpu_custom_call.1} parent=1 // pred_check_branch
      %27 = sbr.rel (0) target = $region17
    $region16: #{tpu_custom_call.1} parent=1 // pred_region
      _
    $region17: #{tpu_custom_call.1} parent=1 // pred_fallthru
      _
    // Predicated region
    $region18: #{tpu_custom_call.1} parent=1 // pred_check
      _
    $region19: #{tpu_custom_call.1} parent=1 // pred_check_branch
      %29 = sbr.rel (0) target = $region21
    $region20: #{tpu_custom_call.1} parent=1 // pred_region
      _
    $region21: #{tpu_custom_call.1} parent=1 // pred_fallthru
      _
    // Predicated region
    $region22: #{tpu_custom_call.1} parent=1 // pred_check
      _
    $region23: #{tpu_custom_call.1} parent=1 // pred_check_branch
      %31 = sbr.rel (0) target = $region25
    $region24: #{tpu_custom_call.1} parent=1 // pred_region
      %33 = dma.done [#allocation3], 128
    $region25: #{tpu_custom_call.1} parent=1 // pred_fallthru
      _
    %v34 = vld [vmem:[%s0] sm:$0xff]
    %v35 = vmul.f32 %v34, %v34
    %vm36 = vcmask 261120
    %v37 = vsel %vm36, %v35, 0.0
    %38 = vadd.xlane.f32.xlu0 %v37
    %v39 = vpop.xlane.xlu0 %38
    %v40 = vrsqrt.pop %v39
    %v41 = vmul.f32 %v40, %v39
    %v42 = vmul.f32 %v41, %v40
    %v43 = vmul.f32 0.5, %v42
    %v44 = vsub.f32 1.5, %v43
    %v45 = vmul.f32 %v40, %v44
    %v46 = vmul.f32 %v39, %v45
    %vm47 = vcmp.eq.f32.partialorder %v39, inf
    %v48 = vsel %vm47, %v39, %v46
    %vm49 = vcmp.eq.f32.partialorder %v39, 0.0
    %v50 = vand.u32 %v39, 2147483648
    %v51 = vsel %vm49, %v50, %v48
    %v52 = vmax.f32 %v51, 1e-12
    %v53 = vrcp.pop %v52
    %v54 = vmul.f32 %v52, %v53
    %v55 = vsub.f32 1.0, %v54
    %v56 = vmul.f32 %v53, %v55
    %v57 = vadd.f32 %v53, %v56
    %vm58 = vweird.f32 %v52
    %vm59 = vweird.f32 %v53
    %vm60 = vmor %vm58, %vm59
    %v61 = vsel %vm60, %v53, %v57
    %v62 = vand.u32 2147483647, %v52
    %vm63 = vcmp.eq.f32.partialorder %v62, 8.507059e+37
    %v64 = vand.u32 %v52, 2147483648
    %v65 = vor.u32 1.1754944e-38, %v64
    %v66 = vsel %vm63, %v65, %v61
    %v67 = vmul.f32 %v34, %v66
    %vm68 = vcmp.gt.f32.partialorder %v51, 0.0
    %v69 = vsel %vm68, 1, 0
    %v70 = vcvt.s32.f32 %v69
    %v71 = vld [vmem:[#allocation2] sm:$0xff]
    %v73 = vsel %vm36, %v67, 0
    %v76 = vsel %vm36, %v71, 0
    %78 = vmatpush.xpose.msra.mxu0 0.0
    %79 = vmatpush.xpose.msra.mxu0 0.0
    %80 = vmatpush.xpose.msra.mxu0 0.0
    %81 = vmatpush.xpose.msra.mxu0 0.0
    %82 = vmatpush.xpose.msra.mxu0 0.0
    %83 = vmatpush.xpose.msra.mxu0 0.0
    %84 = vmatpush.xpose.msra.mxu0 0.0
    %85 = vmatpush.xpose.msra.mxu0 0.0
    %86 = vmatpush.xpose.msra.mxu0 0.0
    %87 = vmatpush.xpose.msra.mxu0 0.0
    %88 = vmatpush.xpose.msra.mxu0 0.0
    %89 = vmatpush.xpose.msra.mxu0 0.0
    %90 = vmatpush.xpose.msra.mxu0 0.0
    %91 = vmatpush.xpose.msra.mxu0 0.0
    %92 = vmatpush.xpose.msra.mxu0 0.0
    %93 = vmatpush.xpose.msra.mxu0 %v76
    %94 = vmatmul.f32.gmra.mxu0 %v73
    %v95 = vpop.f32.mrf.mxu0
    %v96 = vadd.f32 0.0, %v95
    %97 = vdwg.mxu0
    %v98 = vld [vmem:[%s2] sm:$0x1]
    %v99 = vmul.f32 %v70, 0.5
    %v100 = vsub.f32 1.0, %v99
    %v101 = vmul.f32 %v98, 0.5
    %v103 = vperm.slane %v101, 0
    %v105 = vsub.f32 %v100, %v103
    %v106 = vadd.f32 %v105, %v96
    %v107 = vmul.f32 %v106, 10.0
    %vm108 = vcmask 64512
    %v109 = vsel %vm108, %v107, -inf
    %110 = vmax.xlane.f32.xlu0 %v109
    %v111 = vpop.xlane.xlu0 %110
    %v112 = vsub.f32 %v107, %v111
    %v113 = vmul.f32 %v112, 1.442695
    %v114 = vpow.pop %v113
    %v115 = vsel %vm108, %v114, 0.0
    %116 = vadd.xlane.f32.xlu0 %v115
    %v117 = vpop.xlane.xlu0 %116
    %v118 = vrcp.pop %v117
    %v119 = vmul.f32 %v117, %v118
    %v120 = vsub.f32 1.0, %v119
    %v121 = vmul.f32 %v118, %v120
    %v122 = vadd.f32 %v118, %v121
    %vm123 = vweird.f32 %v117
    %vm124 = vweird.f32 %v118
    %vm125 = vmor %vm123, %vm124
    %v126 = vsel %vm125, %v118, %v122
    %v127 = vand.u32 2147483647, %v117
    %vm128 = vcmp.eq.f32.partialorder %v127, 8.507059e+37
    %v129 = vand.u32 %v117, 2147483648
    %v130 = vor.u32 1.1754944e-38, %v129
    %v131 = vsel %vm128, %v130, %v126
    %v132 = vmul.f32 %v114, %v131
    %v133 = vld [vmem:[%s3] sm:$0xff]
    %v134 = vld [vmem:[%s4] sm:$0x1]
    %135 = vset.pattern.permute.xlu0 0
    %136 = vperm.xlu0 %135, %v133
    %v137 = vpop.permute.xlu0 %136
    %v138 = vperm.slane %v134, 0
    %vm139 = vcmp.eq.s32.totalorder %v137, %v138
    %v140 = vsub.f32 1.0, %v132
    %v141 = vmax.f32 %v140, 0.0
    %v142 = vsel %vm139, %v132, %v141
    %v143 = vadd.f32 %v142, 1e-09
    %v144 = vlog2.pop %v143
    %v145 = vmul.f32 %v144, 0.6931472
    %v146 = vsub.f32 0.0, %v145
    %v147 = vsel %vm139, 1, 0
    %v148 = vcvt.s32.f32 %v147
    %v149 = vsel %vm108, %v148, 0.0
    %150 = vadd.xlane.f32.xlu0 %v149
    %v151 = vpop.xlane.xlu0 %150
    %v152 = vsel %vm108, %v146, 0.0
    %153 = vadd.xlane.f32.xlu0 %v152
    %v154 = vpop.xlane.xlu0 %153
    %v155 = vrcp.pop %v151
    %v156 = vmul.f32 %v151, %v155
    %v157 = vsub.f32 1.0, %v156
    %v158 = vmul.f32 %v155, %v157
    %v159 = vadd.f32 %v155, %v158
    %vm160 = vweird.f32 %v151
    %vm161 = vweird.f32 %v155
    %vm162 = vmor %vm160, %vm161
    %v163 = vsel %vm162, %v155, %v159
    %v164 = vand.u32 2147483647, %v151
    %vm165 = vcmp.eq.f32.partialorder %v164, 8.507059e+37
    %v166 = vand.u32 %v151, 2147483648
    %v167 = vor.u32 1.1754944e-38, %v166
    %v168 = vsel %vm165, %v167, %v163
    %v169 = vmul.f32 %v154, %v168
    %vm170 = vcmask 7168
    %171 = vst.msk [vmem:[%s5] sm:$0xff] %vm170, %v169
    // Predicated region
    $region26: #{tpu_custom_call.1} parent=1 // pred_check
      _
    $region27: #{tpu_custom_call.1} parent=1 // pred_check_branch
      %173 = sbr.rel (0) target = $region29
    $region28: #{tpu_custom_call.1} parent=1 // pred_region
      _
    $region29: #{tpu_custom_call.1} parent=1 // pred_fallthru
      _
    // Predicated region
    $region30: #{tpu_custom_call.1} parent=1 // pred_check
      _
    $region31: #{tpu_custom_call.1} parent=1 // pred_check_branch
      %175 = sbr.rel (0) target = $region33
    $region32: #{tpu_custom_call.1} parent=1 // pred_region
      _
    $region33: #{tpu_custom_call.1} parent=1 // pred_fallthru
      _
    %176 = vsyncpa [#allocation3], 1

</llo_original>
